<compile_context>
chip_gen: v5e
topology: v5e:2x2
jax: 0.10.0
libtpu: 0.0.40
codegen_flags: <defaults>
</compile_context>

<pallas_src>
import functools

import jax
import jax.numpy as jnp
from jax.experimental import pallas as pl
from jax.experimental.pallas import tpu as pltpu


def _round_up(n, m):
    return ((n + m - 1) // m) * m


def _qnet_kernel(x_ref, w1_ref, b1_ref, w2_ref, b2_ref, o_ref):
    # x_ref:  (TB, K_pad)           f32
    # w1_ref: (K_pad, H)   bf16, b1_ref: (1, H)   f32
    # w2_ref: (H, N_pad)   bf16, b2_ref: (1, N_pad) f32
    # o_ref:  (TB, N_pad)           f32
    x = x_ref[...].astype(jnp.bfloat16)
    h = jnp.dot(x, w1_ref[...], preferred_element_type=jnp.float32) + b1_ref[...]
    h = jnp.maximum(h, 0.0)  # ReLU in f32
    q = jnp.dot(h.astype(jnp.bfloat16), w2_ref[...],
                preferred_element_type=jnp.float32) + b2_ref[...]
    o_ref[...] = q.astype(o_ref.dtype)


def qnetwork_forward(state, kernel_params, num_actions, *, block_b=None):
    """state: (B, ...) -> flattened to (B, state_size) like state.view(B, -1).

    kernel_params: (w1_pad bf16 (K_pad,H), b1 f32 (1,H), w2_pad bf16 (H,N_pad), b2_pad f32 (1,N_pad))
    Returns (B, num_actions) float32 Q-values.
    """
    w1, b1, w2, b2 = kernel_params
    B = state.shape[0]
    x = state.reshape(B, -1).astype(jnp.float32)  # the .view() flatten

    k_logical = x.shape[1]
    k_pad, hidden = w1.shape
    n_pad = w2.shape[1]
    assert k_pad >= k_logical and n_pad >= num_actions

    # Pad feature (K) axis with zeros to the MXU-aligned width baked into w1.
    if k_pad > k_logical:
        x = jnp.pad(x, ((0, 0), (0, k_pad - k_logical)))

    # Batch tile: multiple of 8 (f32 sublane), capped at 256 so big batches get a real grid.
    if block_b is None:
        block_b = min(256, _round_up(B, 8))
    b_pad = _round_up(B, block_b)
    if b_pad > B:
        x = jnp.pad(x, ((0, b_pad - B), (0, 0)))
    num_blocks = b_pad // block_b

    out = pl.pallas_call(
        _qnet_kernel,
        out_shape=jax.ShapeDtypeStruct((b_pad, n_pad), jnp.float32),
        grid=(num_blocks,),
        in_specs=[
            pl.BlockSpec((block_b, k_pad), lambda i: (i, 0)),   # activations: pipelined over batch
            pl.BlockSpec((k_pad, hidden), lambda i: (0, 0)),    # weights: VMEM-resident
            pl.BlockSpec((1, hidden), lambda i: (0, 0)),
            pl.BlockSpec((hidden, n_pad), lambda i: (0, 0)),
            pl.BlockSpec((1, n_pad), lambda i: (0, 0)),
        ],
        out_specs=pl.BlockSpec((block_b, n_pad), lambda i: (i, 0)),
        compiler_params=pltpu.CompilerParams(dimension_semantics=("parallel",)),
    )(x, w1, b1, w2, b2)

    # Slice away batch + action padding (do this before any argmax over actions!).
    return out[:B, :num_actions]


def init_params(key, state_size=240, hidden_dim1=128, num_actions=61):
    # Deterministic synthetic init (PyTorch-style uniform bounds), stored as (in, out), f32.
    k1, k2, k3, k4 = jax.random.split(key, 4)
    bound1 = 1.0 / (state_size ** 0.5)
    bound2 = 1.0 / (hidden_dim1 ** 0.5)
    w1 = jax.random.uniform(k1, (state_size, hidden_dim1), jnp.float32, -bound1, bound1)
    b1 = jax.random.uniform(k2, (1, hidden_dim1), jnp.float32, -bound1, bound1)
    w2 = jax.random.uniform(k3, (hidden_dim1, num_actions), jnp.float32, -bound2, bound2)
    b2 = jax.random.uniform(k4, (1, num_actions), jnp.float32, -bound2, bound2)
    return w1, b1, w2, b2


def prepare_kernel_params(logical_params, *, k_align=256, n_align=128):
    """Pad K (state_size) and N (num_actions) to lane-aligned widths; cast weights to bf16."""
    w1, b1, w2, b2 = logical_params
    state_size, hidden = w1.shape
    num_actions = w2.shape[1]
    k_pad = _round_up(state_size, k_align)
    n_pad = _round_up(num_actions, n_align)
    w1p = jnp.pad(w1, ((0, k_pad - state_size), (0, 0))).astype(jnp.bfloat16)
    w2p = jnp.pad(w2, ((0, 0), (0, n_pad - num_actions))).astype(jnp.bfloat16)
    b2p = jnp.pad(b2, ((0, 0), (0, n_pad - num_actions))).astype(jnp.float32)
    return (w1p, b1.astype(jnp.float32), w2p, b2p)


def _reference_bf16(x, logical_params):
    # Same math / dtypes as the kernel (bf16 weights+acts into the MXU, f32 accumulate).
    w1, b1, w2, b2 = logical_params
    h = jnp.dot(x.astype(jnp.bfloat16), w1.astype(jnp.bfloat16),
                preferred_element_type=jnp.float32) + b1
    h = jnp.maximum(h, 0.0)
    return jnp.dot(h.astype(jnp.bfloat16), w2.astype(jnp.bfloat16),
                   preferred_element_type=jnp.float32) + b2


def _reference_f32(x, logical_params):
    w1, b1, w2, b2 = logical_params
    return jnp.maximum(x @ w1 + b1, 0.0) @ w2 + b2


if __name__ == "__main__":
    key = jax.random.PRNGKey(0)
    pkey, xkey, xkey2 = jax.random.split(key, 3)

    num_actions, state_size, hidden = 61, 240, 128
    logical_params = init_params(pkey, state_size, hidden, num_actions)
    kernel_params = prepare_kernel_params(logical_params)

    fwd = jax.jit(functools.partial(qnetwork_forward, num_actions=num_actions))

    # Small case: state of shape (2, 4, 60) -> view(B, -1) gives (2, 240).
    state = jax.random.normal(xkey, (2, 4, 60), dtype=jnp.float32)
    out = jax.block_until_ready(fwd(state, kernel_params))
    assert out.shape == (2, num_actions)

    x = state.reshape(state.shape[0], -1)
    ref_bf16 = _reference_bf16(x, logical_params)
    ref_f32 = _reference_f32(x, logical_params)
    assert jnp.allclose(out, ref_bf16, atol=1e-3, rtol=1e-3), "mismatch vs bf16 reference"
    assert jnp.allclose(out, ref_f32, atol=5e-2, rtol=5e-2), "mismatch vs f32 reference"

    # Larger batch exercising multiple grid steps + batch padding (block_b=128, B=300 -> 3 blocks).
    state_big = jax.random.normal(xkey2, (300, 4, 60), dtype=jnp.float32)
    out_big = jax.block_until_ready(
        qnetwork_forward(state_big, kernel_params, num_actions, block_b=128))
    xb = state_big.reshape(300, -1)
    assert out_big.shape == (300, num_actions)
    assert jnp.allclose(out_big, _reference_bf16(xb, logical_params), atol=1e-3, rtol=1e-3)

    print("KERNEL_OK")
</pallas_src>

<mosaic_0001>
module attributes {stable_mosaic.version = 11 : i64} {
  func.func @_qnet_kernel(%arg0: i32, %arg1: memref<8x256xf32, #tpu.memory_space<vmem>>, %arg2: memref<256x128xbf16, #tpu.memory_space<vmem>>, %arg3: memref<1x128xf32, #tpu.memory_space<vmem>>, %arg4: memref<128x128xbf16, #tpu.memory_space<vmem>>, %arg5: memref<1x128xf32, #tpu.memory_space<vmem>>, %arg6: memref<8x128xf32, #tpu.memory_space<vmem>>) attributes {dimension_semantics = [#tpu.dimension_semantics<parallel>], iteration_bounds = array<i64: 1>, scalar_prefetch = 0 : i64, scratch_operands = 0 : i64, tpu.core_type = #tpu.core_type<tc>, window_params = [{transform_indices = @transform_0, window_bounds = array<i64: 8, 256>}, {pipeline_mode = #tpu.pipeline_mode<synchronous>, transform_indices = @transform_1, window_bounds = array<i64: 256, 128>}, {pipeline_mode = #tpu.pipeline_mode<synchronous>, transform_indices = @transform_2, window_bounds = array<i64: 1, 128>}, {pipeline_mode = #tpu.pipeline_mode<synchronous>, transform_indices = @transform_3, window_bounds = array<i64: 128, 128>}, {pipeline_mode = #tpu.pipeline_mode<synchronous>, transform_indices = @transform_4, window_bounds = array<i64: 1, 128>}, {transform_indices = @transform_5, window_bounds = array<i64: 8, 128>}]} {
    %c0 = arith.constant 0 : index
    %c0_0 = arith.constant 0 : index
    %0 = vector.load %arg1[%c0, %c0_0] : memref<8x256xf32, #tpu.memory_space<vmem>>, vector<8x256xf32>
    %1 = arith.truncf %0 : vector<8x256xf32> to vector<8x256xbf16>
    %c0_1 = arith.constant 0 : index
    %c0_2 = arith.constant 0 : index
    %2 = vector.load %arg2[%c0_1, %c0_2] : memref<256x128xbf16, #tpu.memory_space<vmem>>, vector<256x128xbf16>
    %cst = arith.constant dense<0.000000e+00> : vector<8x128xf32>
    %3 = tpu.matmul %1, %2, %cst {dimension_numbers = #tpu.dot_dimension_numbers<[1], [0], [0], [1], [0, 0, 1, 1], [], []>} : vector<8x256xbf16>, vector<256x128xbf16>, vector<8x128xf32> -> vector<8x128xf32>
    %c0_3 = arith.constant 0 : index
    %c0_4 = arith.constant 0 : index
    %4 = vector.load %arg3[%c0_3, %c0_4] : memref<1x128xf32, #tpu.memory_space<vmem>>, vector<1x128xf32>
    %5 = vector.broadcast %4 : vector<1x128xf32> to vector<8x128xf32>
    %6 = arith.addf %3, %5 : vector<8x128xf32>
    %cst_5 = arith.constant 0.000000e+00 : f32
    %7 = vector.broadcast %cst_5 : f32 to vector<8x128xf32>
    %8 = arith.maximumf %6, %7 : vector<8x128xf32>
    %9 = arith.truncf %8 : vector<8x128xf32> to vector<8x128xbf16>
    %c0_6 = arith.constant 0 : index
    %c0_7 = arith.constant 0 : index
    %10 = vector.load %arg4[%c0_6, %c0_7] : memref<128x128xbf16, #tpu.memory_space<vmem>>, vector<128x128xbf16>
    %cst_8 = arith.constant dense<0.000000e+00> : vector<8x128xf32>
    %11 = tpu.matmul %9, %10, %cst_8 {dimension_numbers = #tpu.dot_dimension_numbers<[1], [0], [0], [1], [0, 0, 1, 1], [], []>} : vector<8x128xbf16>, vector<128x128xbf16>, vector<8x128xf32> -> vector<8x128xf32>
    %c0_9 = arith.constant 0 : index
    %c0_10 = arith.constant 0 : index
    %12 = vector.load %arg5[%c0_9, %c0_10] : memref<1x128xf32, #tpu.memory_space<vmem>>, vector<1x128xf32>
    %13 = vector.broadcast %12 : vector<1x128xf32> to vector<8x128xf32>
    %14 = arith.addf %11, %13 : vector<8x128xf32>
    %c0_11 = arith.constant 0 : index
    %c0_12 = arith.constant 0 : index
    %15 = vector.load %arg6[%c0_11, %c0_12] : memref<8x128xf32, #tpu.memory_space<vmem>>, vector<8x128xf32>
    tpu.vector_store %arg6[%c0_11, %c0_12], %14 {strides = array<i32>} : memref<8x128xf32, #tpu.memory_space<vmem>>, vector<8x128xf32>,
    return
  }
  func.func @transform_0(%arg0: i32) -> (i32, i32) {
    %c0_i32 = arith.constant 0 : i32
    %c0_i32_0 = arith.constant 0 : i32
    return %arg0, %c0_i32 : i32, i32
  }
  func.func @transform_1(%arg0: i32) -> (i32, i32) {
    %c0_i32 = arith.constant 0 : i32
    %c0_i32_0 = arith.constant 0 : i32
    %c0_i32_1 = arith.constant 0 : i32
    return %c0_i32, %c0_i32_0 : i32, i32
  }
  func.func @transform_2(%arg0: i32) -> (i32, i32) {
    %c0_i32 = arith.constant 0 : i32
    %c0_i32_0 = arith.constant 0 : i32
    %c0_i32_1 = arith.constant 0 : i32
    return %c0_i32, %c0_i32_0 : i32, i32
  }
  func.func @transform_3(%arg0: i32) -> (i32, i32) {
    %c0_i32 = arith.constant 0 : i32
    %c0_i32_0 = arith.constant 0 : i32
    %c0_i32_1 = arith.constant 0 : i32
    return %c0_i32, %c0_i32_0 : i32, i32
  }
  func.func @transform_4(%arg0: i32) -> (i32, i32) {
    %c0_i32 = arith.constant 0 : i32
    %c0_i32_0 = arith.constant 0 : i32
    %c0_i32_1 = arith.constant 0 : i32
    return %c0_i32, %c0_i32_0 : i32, i32
  }
  func.func @transform_5(%arg0: i32) -> (i32, i32) {
    %c0_i32 = arith.constant 0 : i32
    %c0_i32_0 = arith.constant 0 : i32
    return %arg0, %c0_i32 : i32, i32
  }
}

</mosaic_0001>

<llo_original>
// kernel: qnetwork_forward.1
$region0: #{qnetwork_forward.1}
  #allocation0 [shape = 'u32[]', space=smem, size = 0x4, offset = 0x4, fixed_abs, tag = 'smem constant byte address 0x4 - core index']
  #allocation1 [shape = 'u32[72,128]{1,0:T(1,128)}', space=vmem, size = 0x9000, scoped, tag = 'internal scratch']
  %s0 = inlined_call_operand.vmem [shape: f32[8,256], index: 0, kind: input, shape index: {}]
  %s1 = inlined_call_operand.hbm [shape: bf16[256,128], index: 1, kind: input, shape index: {}]
  %s2 = inlined_call_operand.vmem [shape: f32[1,128], index: 2, kind: input, shape index: {}]
  %s3 = inlined_call_operand.hbm [shape: bf16[128,128], index: 3, kind: input, shape index: {}]
  %s4 = inlined_call_operand.vmem [shape: f32[1,128], index: 4, kind: input, shape index: {}]
  %s5 = inlined_call_operand.vmem [shape: f32[8,128], index: 5, kind: output, shape index: {}]
  %s6 = sld [smem:[#allocation0]]
  $region38: #{qnetwork_forward.1} parent=0
    _
  %s8 = ssub.s32 1, %s6
  %s9 = scalar_select 0, %s8, %s6
  $region1: #{qnetwork_forward.1} parent=0
    #allocation2 [shape = 'u8[65536]{0}', space=vmem, size = 0x10000, scoped, tag = 'input window, operand 1, single buffered']
    #allocation3 [shape = 's32[1]{0}', space=sflag, size = 0x4, scoped, tag = 'scoped memory for qnetwork_forward.1']
    #allocation4 [shape = 'u8[32768]{0}', space=vmem, size = 0x8000, scoped, tag = 'input window, operand 3, single buffered']
    #allocation5 [shape = 's32[1]{0}', space=sflag, size = 0x4, scoped, tag = 'scoped memory for qnetwork_forward.1']
    %10 = vsyncpa [#allocation3], 0
    %11 = vsyncpa [#allocation5], 0
    // Predicated region
    $region2: #{qnetwork_forward.1} parent=1 // pred_check
      _
    $region3: #{qnetwork_forward.1} parent=1 // pred_check_branch
      %13 = sbr.rel (0) target = $region5
    $region4: #{qnetwork_forward.1} parent=1 // pred_region
      _
    $region5: #{qnetwork_forward.1} parent=1 // pred_fallthru
      _
    // Predicated region
    $region6: #{qnetwork_forward.1} parent=1 // pred_check
      _
    $region7: #{qnetwork_forward.1} parent=1 // pred_check_branch
      %15 = sbr.rel (0) target = $region9
    $region8: #{qnetwork_forward.1} parent=1 // pred_region
      %17 = vsyncadd [#allocation3], 0
      %s18 = sshll.u32 %s1, 4
      %s19 = int_to_ptr.hbm [resolvable:$true] %s18
      %s20 = sshll.u32 [#allocation2], 4
      %s21 = int_to_ptr.vmem [resolvable:$true] %s20
      %26 = dma.hbm_to_vmem [thread:$0]  %s19, 2048, %s21, [#allocation3], 64, 64, 4
    $region9: #{qnetwork_forward.1} parent=1 // pred_fallthru
      _
    // Predicated region
    $region10: #{qnetwork_forward.1} parent=1 // pred_check
      _
    $region11: #{qnetwork_forward.1} parent=1 // pred_check_branch
      %28 = sbr.rel (0) target = $region13
    $region12: #{qnetwork_forward.1} parent=1 // pred_region
      _
    $region13: #{qnetwork_forward.1} parent=1 // pred_fallthru
      _
    // Predicated region
    $region14: #{qnetwork_forward.1} parent=1 // pred_check
      _
    $region15: #{qnetwork_forward.1} parent=1 // pred_check_branch
      %30 = sbr.rel (0) target = $region17
    $region16: #{qnetwork_forward.1} parent=1 // pred_region
      %32 = vsyncadd [#allocation5], 0
      %s33 = sshll.u32 %s3, 4
      %s34 = int_to_ptr.hbm [resolvable:$true] %s33
      %s35 = sshll.u32 [#allocation4], 4
      %s36 = int_to_ptr.vmem [resolvable:$true] %s35
      %41 = dma.hbm_to_vmem [thread:$0]  %s34, 1024, %s36, [#allocation5], 64, 64, 4
    $region17: #{qnetwork_forward.1} parent=1 // pred_fallthru
      _
    // Predicated region
    $region18: #{qnetwork_forward.1} parent=1 // pred_check
      _
    $region19: #{qnetwork_forward.1} parent=1 // pred_check_branch
      %43 = sbr.rel (0) target = $region21
    $region20: #{qnetwork_forward.1} parent=1 // pred_region
      _
    $region21: #{qnetwork_forward.1} parent=1 // pred_fallthru
      _
    // Predicated region
    $region22: #{qnetwork_forward.1} parent=1 // pred_check
      _
    $region23: #{qnetwork_forward.1} parent=1 // pred_check_branch
      %45 = sbr.rel (0) target = $region25
    $region24: #{qnetwork_forward.1} parent=1 // pred_region
      %47 = dma.done [#allocation3], 2048
    $region25: #{qnetwork_forward.1} parent=1 // pred_fallthru
      _
    // Predicated region
    $region26: #{qnetwork_forward.1} parent=1 // pred_check
      _
    $region27: #{qnetwork_forward.1} parent=1 // pred_check_branch
      %49 = sbr.rel (0) target = $region29
    $region28: #{qnetwork_forward.1} parent=1 // pred_region
      %51 = dma.done [#allocation5], 1024
    $region29: #{qnetwork_forward.1} parent=1 // pred_fallthru
      _
    %v52 = vld [vmem:[%s0] sm:$0xff]
    %v53 = vld [vmem:[%s0 + $0x8] sm:$0xff]
    %v54 = vpack.c.bf16 %v52, %v52
    %v55 = vpack.c.bf16 %v53, %v53
    %v56 = vld [vmem:[#allocation2] sm:$0xf]
    %v57 = vld [vmem:[#allocation2 + $0x4] sm:$0xf]
    %v58 = vld [vmem:[#allocation2 + $0x8] sm:$0xf]
    %v59 = vld [vmem:[#allocation2 + $0xc] sm:$0xf]
    %v60 = vld [vmem:[#allocation2 + $0x10] sm:$0xf]
    %v61 = vld [vmem:[#allocation2 + $0x14] sm:$0xf]
    %v62 = vld [vmem:[#allocation2 + $0x18] sm:$0xf]
    %v63 = vld [vmem:[#allocation2 + $0x1c] sm:$0xf]
    %v64 = vld [vmem:[#allocation2 + $0x20] sm:$0xf]
    %v65 = vld [vmem:[#allocation2 + $0x24] sm:$0xf]
    %v66 = vld [vmem:[#allocation2 + $0x28] sm:$0xf]
    %v67 = vld [vmem:[#allocation2 + $0x2c] sm:$0xf]
    %v68 = vld [vmem:[#allocation2 + $0x30] sm:$0xf]
    %v69 = vld [vmem:[#allocation2 + $0x34] sm:$0xf]
    %v70 = vld [vmem:[#allocation2 + $0x38] sm:$0xf]
    %v71 = vld [vmem:[#allocation2 + $0x3c] sm:$0xf]
    %v72 = vld [vmem:[#allocation2 + $0x40] sm:$0xf]
    %v73 = vld [vmem:[#allocation2 + $0x44] sm:$0xf]
    %v74 = vld [vmem:[#allocation2 + $0x48] sm:$0xf]
    %v75 = vld [vmem:[#allocation2 + $0x4c] sm:$0xf]
    %v76 = vld [vmem:[#allocation2 + $0x50] sm:$0xf]
    %v77 = vld [vmem:[#allocation2 + $0x54] sm:$0xf]
    %v78 = vld [vmem:[#allocation2 + $0x58] sm:$0xf]
    %v79 = vld [vmem:[#allocation2 + $0x5c] sm:$0xf]
    %v80 = vld [vmem:[#allocation2 + $0x60] sm:$0xf]
    %v81 = vld [vmem:[#allocation2 + $0x64] sm:$0xf]
    %v82 = vld [vmem:[#allocation2 + $0x68] sm:$0xf]
    %v83 = vld [vmem:[#allocation2 + $0x6c] sm:$0xf]
    %v84 = vld [vmem:[#allocation2 + $0x70] sm:$0xf]
    %v85 = vld [vmem:[#allocation2 + $0x74] sm:$0xf]
    %v86 = vld [vmem:[#allocation2 + $0x78] sm:$0xf]
    %v87 = vld [vmem:[#allocation2 + $0x7c] sm:$0xf]
    %v88 = vld [vmem:[%s2] sm:$0x1]
    %v90 = vperm.slane %v88, 0
    %v124 = vunpack.c.l.b16 %v56
    %v125 = vunpack.c.l.b16 %v57
    %v126 = vunpack.c.l.b16 %v58
    %v127 = vunpack.c.l.b16 %v59
    %v128 = vunpack.c.l.b16 %v60
    %v129 = vunpack.c.l.b16 %v61
    %v130 = vunpack.c.l.b16 %v62
    %v131 = vunpack.c.l.b16 %v63
    %v132 = vunpack.c.l.b16 %v64
    %v133 = vunpack.c.l.b16 %v65
    %v134 = vunpack.c.l.b16 %v66
    %v135 = vunpack.c.l.b16 %v67
    %v136 = vunpack.c.l.b16 %v68
    %v137 = vunpack.c.l.b16 %v69
    %v138 = vunpack.c.l.b16 %v70
    %v139 = vunpack.c.l.b16 %v71
    %v140 = vunpack.c.l.b16 %v72
    %v141 = vunpack.c.l.b16 %v73
    %v142 = vunpack.c.l.b16 %v74
    %v143 = vunpack.c.l.b16 %v75
    %v144 = vunpack.c.l.b16 %v76
    %v145 = vunpack.c.l.b16 %v77
    %v146 = vunpack.c.l.b16 %v78
    %v147 = vunpack.c.l.b16 %v79
    %v148 = vunpack.c.l.b16 %v80
    %v149 = vunpack.c.l.b16 %v81
    %v150 = vunpack.c.l.b16 %v82
    %v151 = vunpack.c.l.b16 %v83
    %v152 = vunpack.c.l.b16 %v84
    %v153 = vunpack.c.l.b16 %v85
    %v154 = vunpack.c.l.b16 %v86
    %v155 = vunpack.c.l.b16 %v87
    %v156 = vpack.c.b16 %v125, %v124
    %v157 = vpack.c.b16 %v127, %v126
    %v158 = vpack.c.b16 %v129, %v128
    %v159 = vpack.c.b16 %v131, %v130
    %v160 = vpack.c.b16 %v133, %v132
    %v161 = vpack.c.b16 %v135, %v134
    %v162 = vpack.c.b16 %v137, %v136
    %v163 = vpack.c.b16 %v139, %v138
    %v164 = vpack.c.b16 %v141, %v140
    %v165 = vpack.c.b16 %v143, %v142
    %v166 = vpack.c.b16 %v145, %v144
    %v167 = vpack.c.b16 %v147, %v146
    %v168 = vpack.c.b16 %v149, %v148
    %v169 = vpack.c.b16 %v151, %v150
    %v170 = vpack.c.b16 %v153, %v152
    %v171 = vpack.c.b16 %v155, %v154
    %188 = vmatpush.bf16.msra.mxu0 %v163
    %189 = vmatpush.bf16.msra.mxu0 %v162
    %190 = vmatpush.bf16.msra.mxu0 %v161
    %191 = vmatpush.bf16.msra.mxu0 %v160
    %192 = vmatpush.bf16.msra.mxu0 %v159
    %193 = vmatpush.bf16.msra.mxu0 %v158
    %194 = vmatpush.bf16.msra.mxu0 %v157
    %195 = vmatpush.bf16.msra.mxu0 %v156
    %196 = vmatmul.bf16.gmra.mxu0 %v54
    %v197 = vpop.f32.mrf.mxu0
    %v198 = vadd.f32 %v90, %v197
    %v199 = vpop.f32.mrf.mxu0
    %200 = vdwg.mxu0
    %201 = vmatpush.bf16.msra.mxu0 %v171
    %202 = vmatpush.bf16.msra.mxu0 %v170
    %203 = vmatpush.bf16.msra.mxu0 %v169
    %204 = vmatpush.bf16.msra.mxu0 %v168
    %205 = vmatpush.bf16.msra.mxu0 %v167
    %206 = vmatpush.bf16.msra.mxu0 %v166
    %207 = vmatpush.bf16.msra.mxu0 %v165
    %208 = vmatpush.bf16.msra.mxu0 %v164
    %209 = vmatmul.bf16.gmra.mxu0 %v55
    %v210 = vpop.f32.mrf.mxu0
    %v211 = vadd.f32 %v198, %v210
    %v212 = vpop.f32.mrf.mxu0
    %213 = vdwg.mxu0
    %v214 = vmax.f32 %v211, 0.0
    %v215 = vpack.c.bf16 %v214, %v214
    %v216 = vld [vmem:[#allocation4] sm:$0xf]
    %v217 = vld [vmem:[#allocation4 + $0x4] sm:$0xf]
    %v218 = vld [vmem:[#allocation4 + $0x8] sm:$0xf]
    %v219 = vld [vmem:[#allocation4 + $0xc] sm:$0xf]
    %v220 = vld [vmem:[#allocation4 + $0x10] sm:$0xf]
    %v221 = vld [vmem:[#allocation4 + $0x14] sm:$0xf]
    %v222 = vld [vmem:[#allocation4 + $0x18] sm:$0xf]
    %v223 = vld [vmem:[#allocation4 + $0x1c] sm:$0xf]
    %v224 = vld [vmem:[#allocation4 + $0x20] sm:$0xf]
    %v225 = vld [vmem:[#allocation4 + $0x24] sm:$0xf]
    %v226 = vld [vmem:[#allocation4 + $0x28] sm:$0xf]
    %v227 = vld [vmem:[#allocation4 + $0x2c] sm:$0xf]
    %v228 = vld [vmem:[#allocation4 + $0x30] sm:$0xf]
    %v229 = vld [vmem:[#allocation4 + $0x34] sm:$0xf]
    %v230 = vld [vmem:[#allocation4 + $0x38] sm:$0xf]
    %v231 = vld [vmem:[#allocation4 + $0x3c] sm:$0xf]
    %v232 = vld [vmem:[%s4] sm:$0x1]
    %v234 = vperm.slane %v232, 0
    %v252 = vunpack.c.l.b16 %v216
    %v253 = vunpack.c.l.b16 %v217
    %v254 = vunpack.c.l.b16 %v218
    %v255 = vunpack.c.l.b16 %v219
    %v256 = vunpack.c.l.b16 %v220
    %v257 = vunpack.c.l.b16 %v221
    %v258 = vunpack.c.l.b16 %v222
    %v259 = vunpack.c.l.b16 %v223
    %v260 = vunpack.c.l.b16 %v224
    %v261 = vunpack.c.l.b16 %v225
    %v262 = vunpack.c.l.b16 %v226
    %v263 = vunpack.c.l.b16 %v227
    %v264 = vunpack.c.l.b16 %v228
    %v265 = vunpack.c.l.b16 %v229
    %v266 = vunpack.c.l.b16 %v230
    %v267 = vunpack.c.l.b16 %v231
    %v268 = vpack.c.b16 %v253, %v252
    %v269 = vpack.c.b16 %v255, %v254
    %v270 = vpack.c.b16 %v257, %v256
    %v271 = vpack.c.b16 %v259, %v258
    %v272 = vpack.c.b16 %v261, %v260
    %v273 = vpack.c.b16 %v263, %v262
    %v274 = vpack.c.b16 %v265, %v264
    %v275 = vpack.c.b16 %v267, %v266
    %284 = vmatpush.bf16.msra.mxu0 %v275
    %285 = vmatpush.bf16.msra.mxu0 %v274
    %286 = vmatpush.bf16.msra.mxu0 %v273
    %287 = vmatpush.bf16.msra.mxu0 %v272
    %288 = vmatpush.bf16.msra.mxu0 %v271
    %289 = vmatpush.bf16.msra.mxu0 %v270
    %290 = vmatpush.bf16.msra.mxu0 %v269
    %291 = vmatpush.bf16.msra.mxu0 %v268
    %292 = vmatmul.bf16.gmra.mxu0 %v215
    %v293 = vpop.f32.mrf.mxu0
    %v294 = vadd.f32 %v234, %v293
    %v295 = vpop.f32.mrf.mxu0
    %296 = vdwg.mxu0
    %297 = vst [vmem:[%s5] sm:$0xff] %v294
    // Predicated region
    $region30: #{qnetwork_forward.1} parent=1 // pred_check
      _
    $region31: #{qnetwork_forward.1} parent=1 // pred_check_branch
      %299 = sbr.rel (0) target = $region33
    $region32: #{qnetwork_forward.1} parent=1 // pred_region
      _
    $region33: #{qnetwork_forward.1} parent=1 // pred_fallthru
      _
    // Predicated region
    $region34: #{qnetwork_forward.1} parent=1 // pred_check
      _
    $region35: #{qnetwork_forward.1} parent=1 // pred_check_branch
      %301 = sbr.rel (0) target = $region37
    $region36: #{qnetwork_forward.1} parent=1 // pred_region
      _
    $region37: #{qnetwork_forward.1} parent=1 // pred_fallthru
      _
    %302 = vsyncpa [#allocation3], 1
    %303 = vsyncpa [#allocation5], 1

</llo_original>
